<compile_context>
chip_gen: v6e
topology: v6e:2x2x1
jax: 0.10.0
libtpu: 0.0.40
codegen_flags: <defaults>
</compile_context>

<pallas_src>
import jax
import jax.numpy as jnp
import numpy as np
from jax.experimental import pallas as pl
from jax.experimental.pallas import tpu as pltpu

# ---- model dims (from the PyTorch module / ShowerEnv) ----
STATE_DIM = 1
ACTION_DIM = 1
H1 = 400
H2 = 300
INIT_W = 0.003

# ---- padded hidden dims for TPU lane alignment ----
H1_P = 512    # 400 -> 512 (contracting dim of the single real matmul)
H2_P = 384    # 300 -> 384


def _cdiv(a, b):
    return -(-a // b)


def _round_up(a, m):
    return _cdiv(a, m) * m


# ---------------------------------------------------------------------------
# kernel
# ---------------------------------------------------------------------------
def _critic_kernel(sa_ref, w1_ref, b1_ref, w2x_ref, w2a_ref, b2_ref,
                   w3_ref, b3_ref, o_ref):
    sa = sa_ref[...]                                          # (TM, 2) f32
    s = sa[:, 0:1]                                            # (TM, 1)
    a = sa[:, 1:2]                                            # (TM, 1)

    # hidden 1: relu(state @ W1 + b1); rank-1 contraction -> VPU broadcast FMA.
    # Computed in w1's dtype (bf16 on v6e/v7x, f32 on v5e); s cast once.
    h1 = jnp.maximum(s.astype(w1_ref.dtype) * w1_ref[...] + b1_ref[...], 0.0)

    # hidden 2: relu(cat([h1, action]) @ W2 + b2)
    #         == relu(h1 @ W2x + a * w2a_row + b2)
    # The astype below is a no-op when h1 dtype already matches the MXU weight.
    h2 = jnp.dot(h1.astype(w2x_ref.dtype), w2x_ref[...],      # MXU (only matmul)
                 preferred_element_type=jnp.float32)          # (TM, H2_P) f32
    h2 = jnp.maximum(h2 + a * w2a_ref[...] + b2_ref[...], 0.0)

    # output: h2 @ W3 + b3; single real output column -> lane reduce (XLU).
    q = jnp.sum(h2 * w3_ref[...], axis=-1, keepdims=True) + b3_ref[...]
    o_ref[...] = q.astype(o_ref.dtype)


# ---------------------------------------------------------------------------
# parameters
# ---------------------------------------------------------------------------
def make_critic_params(key):
    """Deterministic params matching the PyTorch module's shapes/init bounds."""
    k1, k2, k3, k4 = jax.random.split(key, 4)

    def fanin_uniform(k, shape):
        bound = 1.0 / np.sqrt(shape[0])      # mirrors fanin_: fan_in = size[0]
        return jax.random.uniform(k, shape, jnp.float32, -bound, bound)

    # torch nn.Linear weight shape = (out_features, in_features)
    w1 = fanin_uniform(k1, (H1, STATE_DIM))
    b1 = jnp.zeros((H1,), jnp.float32)
    w2 = fanin_uniform(k2, (H2, H1 + ACTION_DIM))
    b2 = jnp.zeros((H2,), jnp.float32)
    w3 = jax.random.uniform(k3, (1, H2), jnp.float32, -INIT_W, INIT_W)
    b3 = jax.random.uniform(k4, (1,), jnp.float32, -INIT_W, INIT_W)
    return dict(w1=w1, b1=b1, w2=w2, b2=b2, w3=w3, b3=b3)


def prepare_critic_params(params, matmul_dtype=jnp.bfloat16, h1_dtype=jnp.bfloat16):
    """One-time device-side prep (transpose + zero-pad + dtype cast).

    matmul_dtype: dtype of the dominant MXU weight W2x (bf16 recommended on all
                  TPU generations; f32 only for strict-accuracy validation).
    h1_dtype:     dtype of the rank-1 h1 stage (bf16 on v6e/v7x; use f32 on v5e,
                  whose VPU has no native bf16 ALU).
    Call once, keep the result on device, reuse across forward calls."""
    f32 = jnp.float32
    w1 = jnp.asarray(params["w1"], f32)      # (H1, 1)
    w2 = jnp.asarray(params["w2"], f32)      # (H2, H1+1)
    w3 = jnp.asarray(params["w3"], f32)      # (1, H2)

    w1_row = jnp.zeros((1, H1_P), f32).at[0, :H1].set(w1[:, 0]).astype(h1_dtype)
    b1_row = jnp.zeros((1, H1_P), f32).at[0, :H1].set(
        jnp.asarray(params["b1"], f32)).astype(h1_dtype)
    w2x = jnp.zeros((H1_P, H2_P), f32).at[:H1, :H2].set(
        w2[:, :H1].T).astype(matmul_dtype)
    # h2/q stage accumulates in f32, so these stay f32.
    w2a_row = jnp.zeros((1, H2_P), f32).at[0, :H2].set(w2[:, H1])
    b2_row = jnp.zeros((1, H2_P), f32).at[0, :H2].set(jnp.asarray(params["b2"], f32))
    w3_row = jnp.zeros((1, H2_P), f32).at[0, :H2].set(w3[0, :])
    b3 = jnp.asarray(params["b3"], f32).reshape(1, 1)
    return dict(w1=w1_row, b1=b1_row, w2x=w2x, w2a=w2a_row, b2=b2_row,
                w3=w3_row, b3=b3)


# ---------------------------------------------------------------------------
# forward wrapper
# ---------------------------------------------------------------------------
def _choose_tile_m(m, max_tile=2048):
    """Largest tile <= max_tile that (a) amortizes per-step overhead and
    (b) yields >=2 grid steps whenever m > 8 so the 'parallel' grid axis can
    shard across v7x's two TensorCores.  On v5e/v6e (128 MiB VMEM) max_tile
    can be raised to 4096."""
    if m <= 8:
        return 8
    n_tiles = max(2, _cdiv(m, max_tile))
    return _round_up(_cdiv(m, n_tiles), 8)


def _vmem_limit_bytes(tile_m, prepped):
    """Scoped-VMEM request ~2x the true per-tile footprint (no inflated floor)."""
    f32 = 4
    isz = lambda name: jnp.dtype(prepped[name].dtype).itemsize
    # Constant-index weight/bias blocks (still double-buffered by default, but small).
    weights = 2 * (H1_P * H2_P * isz("w2x")              # W2x
                   + 2 * 8 * H1_P * isz("w1")            # w1, b1 rows (sublane-padded)
                   + 3 * 8 * H2_P * f32                  # w2a, b2, w3 rows
                   + 8 * 128 * f32)                      # b3
    io = 2 * tile_m * 128 * f32      # (tm,2) input block, lane-padded, double-buffered
    out = 2 * tile_m * 128 * f32     # (tm,1) output block
    interm = tile_m * H1_P * (isz("w1") + isz("w2x")) \
        + 2 * tile_m * H2_P * f32    # h1 (+cast if dtypes differ), h2 + temp
    est = weights + io + out + interm
    return int(min(64 * 1024 * 1024, max(8 * 1024 * 1024, 2 * est)))


def critic_forward(prepped, state, action, tile_m=None, max_tile=2048):
    """state: (B, T, STATE_DIM), action: (B, T, ACTION_DIM) -> (B, T, 1)."""
    B, T, _ = state.shape
    M = B * T
    tm = tile_m if tile_m is not None else _choose_tile_m(M, max_tile)
    m_pad = _round_up(M, tm)

    # Merge state & action into one (M, 2) column pair: a single narrow input
    # DMA per grid step instead of two lane-padded (tm,1) ones.
    sa = jnp.concatenate(
        [state.reshape(M, STATE_DIM).astype(jnp.float32),
         action.reshape(M, ACTION_DIM).astype(jnp.float32)], axis=1)   # (M, 2)
    if m_pad != M:
        sa = jnp.pad(sa, ((0, m_pad - M), (0, 0)))   # padded rows sliced off below

    row = lambda i: (i, 0)             # row-tiled activations / output
    const = lambda i: (0, 0)           # weights stay VMEM-resident across tiles

    q = pl.pallas_call(
        _critic_kernel,
        out_shape=jax.ShapeDtypeStruct((m_pad, 1), jnp.float32),
        grid=(m_pad // tm,),
        in_specs=[
            pl.BlockSpec((tm, 2), row),           # [state | action] columns
            pl.BlockSpec((1, H1_P), const),       # W1 row
            pl.BlockSpec((1, H1_P), const),       # b1
            pl.BlockSpec((H1_P, H2_P), const),    # W2x (the only matmul weight)
            pl.BlockSpec((1, H2_P), const),       # W2 action row
            pl.BlockSpec((1, H2_P), const),       # b2
            pl.BlockSpec((1, H2_P), const),       # W3 row
            pl.BlockSpec((1, 1), const),          # b3
        ],
        out_specs=pl.BlockSpec((tm, 1), row),
        compiler_params=pltpu.CompilerParams(
            dimension_semantics=("parallel",),    # megacore sharding on v7x
            vmem_limit_bytes=_vmem_limit_bytes(tm, prepped),
        ),
    )(sa, prepped["w1"], prepped["b1"], prepped["w2x"], prepped["w2a"],
      prepped["b2"], prepped["w3"], prepped["b3"])

    # TODO(synk): if q feeds another Pallas stage, keep it on-chip / widen the
    # output instead of round-tripping a lane-sparse (M,1) column through HBM.
    return q[:M].reshape(B, T, 1)


def critic_reference(params, state, action):
    """Pure-JAX reference of the PyTorch forward, for validation."""
    x = jnp.maximum(state @ params["w1"].T + params["b1"], 0.0)
    x = jnp.concatenate([x, action], axis=2)
    x = jnp.maximum(x @ params["w2"].T + params["b2"], 0.0)
    return x @ params["w3"].T + params["b3"]


# ---------------------------------------------------------------------------
if __name__ == "__main__":
    key = jax.random.PRNGKey(0)
    kp, ks, ka = jax.random.split(key, 3)

    B, T = 2, 8                        # B*T = 16 rows (tiny demo -> 2 grid steps)
    params = make_critic_params(kp)
    # state in [0, 100] like the shower temperature; action in [-pi, pi]
    state = jax.random.uniform(ks, (B, T, STATE_DIM), jnp.float32, 0.0, 100.0)
    action = jax.random.uniform(ka, (B, T, ACTION_DIM), jnp.float32,
                                -np.pi, np.pi)

    q_ref = jax.block_until_ready(critic_reference(params, state, action))

    # 1) f32 everywhere: near bit-exact against the reference.
    prepped_f32 = prepare_critic_params(params, matmul_dtype=jnp.float32,
                                        h1_dtype=jnp.float32)
    q_f32 = jax.block_until_ready(critic_forward(prepped_f32, state, action))
    assert q_f32.shape == (B, T, 1)
    np.testing.assert_allclose(np.asarray(q_f32), np.asarray(q_ref),
                               rtol=1e-5, atol=1e-5)

    # 2) Production path for v6e/v7x: bf16 h1 stage + bf16 MXU weight, f32 accum.
    #    (bf16 quantization of h1/state is the dominant error source.)
    prepped_bf16 = prepare_critic_params(params)
    q_bf16 = jax.block_until_ready(critic_forward(prepped_bf16, state, action))
    np.testing.assert_allclose(np.asarray(q_bf16), np.asarray(q_ref),
                               rtol=5e-2, atol=1.5e-1)

    # 3) Production path for v5e: f32 VPU math, bf16 MXU weight.
    prepped_v5e = prepare_critic_params(params, matmul_dtype=jnp.bfloat16,
                                        h1_dtype=jnp.float32)
    q_v5e = jax.block_until_ready(critic_forward(prepped_v5e, state, action))
    np.testing.assert_allclose(np.asarray(q_v5e), np.asarray(q_ref),
                               rtol=5e-2, atol=1.5e-1)

    print("KERNEL_OK")
</pallas_src>

<mosaic_0001>
module attributes {stable_mosaic.version = 11 : i64} {
  func.func @_critic_kernel(%arg0: i32, %arg1: memref<8x2xf32, #tpu.memory_space<vmem>>, %arg2: memref<1x512xf32, #tpu.memory_space<vmem>>, %arg3: memref<1x512xf32, #tpu.memory_space<vmem>>, %arg4: memref<512x384xf32, #tpu.memory_space<vmem>>, %arg5: memref<1x384xf32, #tpu.memory_space<vmem>>, %arg6: memref<1x384xf32, #tpu.memory_space<vmem>>, %arg7: memref<1x384xf32, #tpu.memory_space<vmem>>, %arg8: memref<1x1xf32, #tpu.memory_space<vmem>>, %arg9: memref<8x1xf32, #tpu.memory_space<vmem>>) attributes {dimension_semantics = [#tpu.dimension_semantics<parallel>], iteration_bounds = array<i64: 2>, scalar_prefetch = 0 : i64, scratch_operands = 0 : i64, tpu.core_type = #tpu.core_type<tc>, window_params = [{transform_indices = @transform_0, window_bounds = array<i64: 8, 2>}, {pipeline_mode = #tpu.pipeline_mode<synchronous>, transform_indices = @transform_1, window_bounds = array<i64: 1, 512>}, {pipeline_mode = #tpu.pipeline_mode<synchronous>, transform_indices = @transform_2, window_bounds = array<i64: 1, 512>}, {pipeline_mode = #tpu.pipeline_mode<synchronous>, transform_indices = @transform_3, window_bounds = array<i64: 512, 384>}, {pipeline_mode = #tpu.pipeline_mode<synchronous>, transform_indices = @transform_4, window_bounds = array<i64: 1, 384>}, {pipeline_mode = #tpu.pipeline_mode<synchronous>, transform_indices = @transform_5, window_bounds = array<i64: 1, 384>}, {pipeline_mode = #tpu.pipeline_mode<synchronous>, transform_indices = @transform_6, window_bounds = array<i64: 1, 384>}, {pipeline_mode = #tpu.pipeline_mode<synchronous>, transform_indices = @transform_7, window_bounds = array<i64: 1, 1>}, {transform_indices = @transform_8, window_bounds = array<i64: 8, 1>}]} {
    %c0 = arith.constant 0 : index
    %c0_0 = arith.constant 0 : index
    %0 = vector.load %arg1[%c0, %c0_0] : memref<8x2xf32, #tpu.memory_space<vmem>>, vector<8x2xf32>
    %1 = vector.extract_strided_slice %0 {offsets = [0, 0], sizes = [8, 1], strides = [1, 1]} : vector<8x2xf32> to vector<8x1xf32>
    %2 = vector.extract_strided_slice %0 {offsets = [0, 1], sizes = [8, 1], strides = [1, 1]} : vector<8x2xf32> to vector<8x1xf32>
    %c0_1 = arith.constant 0 : index
    %c0_2 = arith.constant 0 : index
    %3 = vector.load %arg2[%c0_1, %c0_2] : memref<1x512xf32, #tpu.memory_space<vmem>>, vector<1x512xf32>
    %4 = vector.broadcast %1 : vector<8x1xf32> to vector<8x512xf32>
    %5 = vector.broadcast %3 : vector<1x512xf32> to vector<8x512xf32>
    %6 = arith.mulf %4, %5 : vector<8x512xf32>
    %c0_3 = arith.constant 0 : index
    %c0_4 = arith.constant 0 : index
    %7 = vector.load %arg3[%c0_3, %c0_4] : memref<1x512xf32, #tpu.memory_space<vmem>>, vector<1x512xf32>
    %8 = vector.broadcast %7 : vector<1x512xf32> to vector<8x512xf32>
    %9 = arith.addf %6, %8 : vector<8x512xf32>
    %cst = arith.constant 0.000000e+00 : f32
    %10 = vector.broadcast %cst : f32 to vector<8x512xf32>
    %11 = arith.maximumf %9, %10 : vector<8x512xf32>
    %c0_5 = arith.constant 0 : index
    %c0_6 = arith.constant 0 : index
    %12 = vector.load %arg4[%c0_5, %c0_6] : memref<512x384xf32, #tpu.memory_space<vmem>>, vector<512x384xf32>
    %cst_7 = arith.constant dense<0.000000e+00> : vector<8x384xf32>
    %13 = tpu.matmul %11, %12, %cst_7 {dimension_numbers = #tpu.dot_dimension_numbers<[1], [0], [0], [1], [0, 0, 1, 1], [], []>} : vector<8x512xf32>, vector<512x384xf32>, vector<8x384xf32> -> vector<8x384xf32>
    %c0_8 = arith.constant 0 : index
    %c0_9 = arith.constant 0 : index
    %14 = vector.load %arg5[%c0_8, %c0_9] : memref<1x384xf32, #tpu.memory_space<vmem>>, vector<1x384xf32>
    %15 = vector.broadcast %2 : vector<8x1xf32> to vector<8x384xf32>
    %16 = vector.broadcast %14 : vector<1x384xf32> to vector<8x384xf32>
    %17 = arith.mulf %15, %16 : vector<8x384xf32>
    %18 = arith.addf %13, %17 : vector<8x384xf32>
    %c0_10 = arith.constant 0 : index
    %c0_11 = arith.constant 0 : index
    %19 = vector.load %arg6[%c0_10, %c0_11] : memref<1x384xf32, #tpu.memory_space<vmem>>, vector<1x384xf32>
    %20 = vector.broadcast %19 : vector<1x384xf32> to vector<8x384xf32>
    %21 = arith.addf %18, %20 : vector<8x384xf32>
    %cst_12 = arith.constant 0.000000e+00 : f32
    %22 = vector.broadcast %cst_12 : f32 to vector<8x384xf32>
    %23 = arith.maximumf %21, %22 : vector<8x384xf32>
    %c0_13 = arith.constant 0 : index
    %c0_14 = arith.constant 0 : index
    %24 = vector.load %arg7[%c0_13, %c0_14] : memref<1x384xf32, #tpu.memory_space<vmem>>, vector<1x384xf32>
    %25 = vector.broadcast %24 : vector<1x384xf32> to vector<8x384xf32>
    %26 = arith.mulf %23, %25 : vector<8x384xf32>
    %cst_15 = arith.constant dense<0.000000e+00> : vector<8xf32>
    %27 = vector.multi_reduction <add>, %26, %cst_15 [1] : vector<8x384xf32> to vector<8xf32>
    %28 = vector.shape_cast %27 : vector<8xf32> to vector<8x1xf32>
    %c0_16 = arith.constant 0 : index
    %c0_17 = arith.constant 0 : index
    %29 = vector.load %arg8[%c0_16, %c0_17] : memref<1x1xf32, #tpu.memory_space<vmem>>, vector<1x1xf32>
    %30 = vector.broadcast %29 : vector<1x1xf32> to vector<8x1xf32>
    %31 = arith.addf %28, %30 : vector<8x1xf32>
    %c0_18 = arith.constant 0 : index
    %c0_19 = arith.constant 0 : index
    %32 = vector.load %arg9[%c0_18, %c0_19] : memref<8x1xf32, #tpu.memory_space<vmem>>, vector<8x1xf32>
    tpu.vector_store %arg9[%c0_18, %c0_19], %31 {strides = array<i32>} : memref<8x1xf32, #tpu.memory_space<vmem>>, vector<8x1xf32>,
    return
  }
  func.func @transform_0(%arg0: i32) -> (i32, i32) {
    %c0_i32 = arith.constant 0 : i32
    %c0_i32_0 = arith.constant 0 : i32
    return %arg0, %c0_i32 : i32, i32
  }
  func.func @transform_1(%arg0: i32) -> (i32, i32) {
    %c0_i32 = arith.constant 0 : i32
    %c0_i32_0 = arith.constant 0 : i32
    %c0_i32_1 = arith.constant 0 : i32
    return %c0_i32, %c0_i32_0 : i32, i32
  }
  func.func @transform_2(%arg0: i32) -> (i32, i32) {
    %c0_i32 = arith.constant 0 : i32
    %c0_i32_0 = arith.constant 0 : i32
    %c0_i32_1 = arith.constant 0 : i32
    return %c0_i32, %c0_i32_0 : i32, i32
  }
  func.func @transform_3(%arg0: i32) -> (i32, i32) {
    %c0_i32 = arith.constant 0 : i32
    %c0_i32_0 = arith.constant 0 : i32
    %c0_i32_1 = arith.constant 0 : i32
    return %c0_i32, %c0_i32_0 : i32, i32
  }
  func.func @transform_4(%arg0: i32) -> (i32, i32) {
    %c0_i32 = arith.constant 0 : i32
    %c0_i32_0 = arith.constant 0 : i32
    %c0_i32_1 = arith.constant 0 : i32
    return %c0_i32, %c0_i32_0 : i32, i32
  }
  func.func @transform_5(%arg0: i32) -> (i32, i32) {
    %c0_i32 = arith.constant 0 : i32
    %c0_i32_0 = arith.constant 0 : i32
    %c0_i32_1 = arith.constant 0 : i32
    return %c0_i32, %c0_i32_0 : i32, i32
  }
  func.func @transform_6(%arg0: i32) -> (i32, i32) {
    %c0_i32 = arith.constant 0 : i32
    %c0_i32_0 = arith.constant 0 : i32
    %c0_i32_1 = arith.constant 0 : i32
    return %c0_i32, %c0_i32_0 : i32, i32
  }
  func.func @transform_7(%arg0: i32) -> (i32, i32) {
    %c0_i32 = arith.constant 0 : i32
    %c0_i32_0 = arith.constant 0 : i32
    %c0_i32_1 = arith.constant 0 : i32
    return %c0_i32, %c0_i32_0 : i32, i32
  }
  func.func @transform_8(%arg0: i32) -> (i32, i32) {
    %c0_i32 = arith.constant 0 : i32
    %c0_i32_0 = arith.constant 0 : i32
    return %arg0, %c0_i32 : i32, i32
  }
}

</mosaic_0001>

<llo_original>
// kernel: tpu_custom_call.1
$region0: #{tpu_custom_call.1}
  #allocation0 [shape = 'u32[]', space=smem, size = 0x4, offset = 0x4, fixed_abs, tag = 'smem constant byte address 0x4 - core index']
  #allocation1 [shape = 'u32[144,128]{1,0:T(1,128)}', space=vmem, size = 0x12000, scoped, tag = 'internal scratch']
  #allocation2 [shape = 'f32[1,1]{1,0:T(1,128)S(1)}', space=vmem, size = 0x200, scoped, tag = 'scoped memory for tpu_custom_call.1']
  %s0 = inlined_call_operand.vmem [shape: f32[16,2], index: 0, kind: input, shape index: {}]
  %s1 = inlined_call_operand.vmem [shape: f32[1,512], index: 1, kind: input, shape index: {}]
  %s2 = inlined_call_operand.vmem [shape: f32[1,512], index: 2, kind: input, shape index: {}]
  %s3 = inlined_call_operand.hbm [shape: f32[512,384], index: 3, kind: input, shape index: {}]
  %s4 = inlined_call_operand.vmem [shape: f32[1,384], index: 4, kind: input, shape index: {}]
  %s5 = inlined_call_operand.vmem [shape: f32[1,384], index: 5, kind: input, shape index: {}]
  %s6 = inlined_call_operand.vmem [shape: f32[1,384], index: 6, kind: input, shape index: {}]
  %s7 = inlined_call_operand.<no memory space> [shape: f32[1,1], index: 7, kind: input, shape index: {}]
  %s8 = inlined_call_operand.vmem [shape: f32[16,1], index: 8, kind: output, shape index: {}]
  %s9 = sld [smem:[#allocation0]]
  $region69: #{tpu_custom_call.1} parent=0
    _
  %s11 = ssub.s32 1, %s9
  %s12 = scalar_select 0, %s11, %s9
  %v13 = vstv %s7
  %14 = vst [vmem:[#allocation2] sm:$0x1] %v13
  $region1: #{tpu_custom_call.1} parent=0
    #allocation3 [shape = 'u8[786432]{0}', space=vmem, size = 0xc0000, scoped, tag = 'input window, operand 3, single buffered']
    #allocation4 [shape = 's32[2]{0}', space=sflag, size = 0x8, scoped, tag = 'scoped memory for tpu_custom_call.1']
    %15 = vsyncpa [#allocation4], 0
    loop: start=0, step=1, limit=4
    $region2: #{tpu_custom_call.1} parent=1 // loop_pre_header
      _
    $region3: #{tpu_custom_call.1} parent=1 // loop_header
      %s17 = sphi 0, %s21
      %p18 = scmp.ge.s32.totalorder %s17, 4
      %s27 = sphi 0, %s29
      %s30 = sphi 0, %s27
      %s31 = sphi 0, %s30
      %s47 = sphi 0, %s31
      %s51 = sphi 0, %s51
      %s53 = sphi 0, %s51
      %s54 = sphi 0, %s53
      %s68 = sphi 0, %s54
      %s72 = sphi 0, %s72
      %s74 = sphi 0, %s72
      %s75 = sphi 0, %s74
      %s89 = sphi 0, %s75
      %s93 = sphi 0, %s93
      %s95 = sphi 0, %s93
      %s96 = sphi 0, %s95
      %s110 = sphi 0, %s96
      %s114 = sphi 0, %s114
      %s116 = sphi 0, %s114
      %s117 = sphi 0, %s116
      %s131 = sphi 0, %s117
      %s135 = sphi 0, %s135
      %s137 = sphi 0, %s135
      %s138 = sphi 0, %s137
      %s152 = sphi 0, %s138
      %s156 = sphi 0, %s156
      %s158 = sphi 0, %s156
      %s159 = sphi 0, %s158
      %s173 = sphi 0, %s159
      %s177 = sphi 0, %s177
      %s179 = sphi 0, %s177
      %s180 = sphi 0, %s179
      %s194 = sphi 0, %s180
      %s200 = sphi 0, %s202
      %s203 = sphi 0, %s200
      %s204 = sphi 0, %s203
      %s220 = sphi 0, %s204
    $region4: #{tpu_custom_call.1} parent=1 // loop_header_branch
      %20 = sbr.rel (%p18) target = $region8
    $region5: #{tpu_custom_call.1} parent=1 // loop_body
      %s22 = ssub.s32 %s17, 1
      %s23 = ssub.s32 %s17, 2
      %s24 = sadd.s32 %s17, 1
      %s25 = ssub.s32 %s17, %s24
      %p26 = scmp.eq.s32.totalorder %s25, 0
      %s28 = sadd.s32 %s27, 1
      %s29 = scalar_select %p26, %s27, %s28
      %p32 = pneg %p26
      %p33 = scmp.eq.s32.totalorder %s17, 1
      %p34 = por %p32, %p33
      %p35 = scmp.ne.s32.totalorder %s27, %s30
      %p36 = scmp.eq.s32.totalorder %s17, 0
      %p37 = por %p35, %p36
      %p38 = scmp.ne.s32.totalorder %s27, %s30
      %p39 = scmp.eq.s32.totalorder %s22, 1
      %p40 = por %p38, %p39
      %p41 = scmp.ne.s32.totalorder %s30, %s31
      %p42 = scmp.eq.s32.totalorder %s22, 0
      %p43 = por %p41, %p42
      %p44 = scmp.ne.s32.totalorder %s30, %s31
      %p45 = scmp.eq.s32.totalorder %s23, 1
      %p46 = por %p44, %p45
      %p48 = scmp.ne.s32.totalorder %s31, %s47
      %p49 = scmp.eq.s32.totalorder %s23, 0
      %p50 = por %p48, %p49
      %s52 = sadd.s32 %s51, 1
      %p55 = scmp.eq.s32.totalorder %s17, 1
      %p56 = scmp.ne.s32.totalorder %s51, %s53
      %p57 = scmp.eq.s32.totalorder %s17, 0
      %p58 = por %p56, %p57
      %p59 = scmp.ne.s32.totalorder %s51, %s53
      %p60 = scmp.eq.s32.totalorder %s22, 1
      %p61 = por %p59, %p60
      %p62 = scmp.ne.s32.totalorder %s53, %s54
      %p63 = scmp.eq.s32.totalorder %s22, 0
      %p64 = por %p62, %p63
      %p65 = scmp.ne.s32.totalorder %s53, %s54
      %p66 = scmp.eq.s32.totalorder %s23, 1
      %p67 = por %p65, %p66
      %p69 = scmp.ne.s32.totalorder %s54, %s68
      %p70 = scmp.eq.s32.totalorder %s23, 0
      %p71 = por %p69, %p70
      %s73 = sadd.s32 %s72, 1
      %p76 = scmp.eq.s32.totalorder %s17, 1
      %p77 = scmp.ne.s32.totalorder %s72, %s74
      %p78 = scmp.eq.s32.totalorder %s17, 0
      %p79 = por %p77, %p78
      %p80 = scmp.ne.s32.totalorder %s72, %s74
      %p81 = scmp.eq.s32.totalorder %s22, 1
      %p82 = por %p80, %p81
      %p83 = scmp.ne.s32.totalorder %s74, %s75
      %p84 = scmp.eq.s32.totalorder %s22, 0
      %p85 = por %p83, %p84
      %p86 = scmp.ne.s32.totalorder %s74, %s75
      %p87 = scmp.eq.s32.totalorder %s23, 1
      %p88 = por %p86, %p87
      %p90 = scmp.ne.s32.totalorder %s75, %s89
      %p91 = scmp.eq.s32.totalorder %s23, 0
      %p92 = por %p90, %p91
      %s94 = sadd.s32 %s93, 1
      %p97 = scmp.eq.s32.totalorder %s17, 1
      %p98 = scmp.ne.s32.totalorder %s93, %s95
      %p99 = scmp.eq.s32.totalorder %s17, 0
      %p100 = por %p98, %p99
      %p101 = scmp.ne.s32.totalorder %s93, %s95
      %p102 = scmp.eq.s32.totalorder %s22, 1
      %p103 = por %p101, %p102
      %p104 = scmp.ne.s32.totalorder %s95, %s96
      %p105 = scmp.eq.s32.totalorder %s22, 0
      %p106 = por %p104, %p105
      %p107 = scmp.ne.s32.totalorder %s95, %s96
      %p108 = scmp.eq.s32.totalorder %s23, 1
      %p109 = por %p107, %p108
      %p111 = scmp.ne.s32.totalorder %s96, %s110
      %p112 = scmp.eq.s32.totalorder %s23, 0
      %p113 = por %p111, %p112
      %s115 = sadd.s32 %s114, 1
      %p118 = scmp.eq.s32.totalorder %s17, 1
      %p119 = scmp.ne.s32.totalorder %s114, %s116
      %p120 = scmp.eq.s32.totalorder %s17, 0
      %p121 = por %p119, %p120
      %p122 = scmp.ne.s32.totalorder %s114, %s116
      %p123 = scmp.eq.s32.totalorder %s22, 1
      %p124 = por %p122, %p123
      %p125 = scmp.ne.s32.totalorder %s116, %s117
      %p126 = scmp.eq.s32.totalorder %s22, 0
      %p127 = por %p125, %p126
      %p128 = scmp.ne.s32.totalorder %s116, %s117
      %p129 = scmp.eq.s32.totalorder %s23, 1
      %p130 = por %p128, %p129
      %p132 = scmp.ne.s32.totalorder %s117, %s131
      %p133 = scmp.eq.s32.totalorder %s23, 0
      %p134 = por %p132, %p133
      %s136 = sadd.s32 %s135, 1
      %p139 = scmp.eq.s32.totalorder %s17, 1
      %p140 = scmp.ne.s32.totalorder %s135, %s137
      %p141 = scmp.eq.s32.totalorder %s17, 0
      %p142 = por %p140, %p141
      %p143 = scmp.ne.s32.totalorder %s135, %s137
      %p144 = scmp.eq.s32.totalorder %s22, 1
      %p145 = por %p143, %p144
      %p146 = scmp.ne.s32.totalorder %s137, %s138
      %p147 = scmp.eq.s32.totalorder %s22, 0
      %p148 = por %p146, %p147
      %p149 = scmp.ne.s32.totalorder %s137, %s138
      %p150 = scmp.eq.s32.totalorder %s23, 1
      %p151 = por %p149, %p150
      %p153 = scmp.ne.s32.totalorder %s138, %s152
      %p154 = scmp.eq.s32.totalorder %s23, 0
      %p155 = por %p153, %p154
      %s157 = sadd.s32 %s156, 1
      %p160 = scmp.eq.s32.totalorder %s17, 1
      %p161 = scmp.ne.s32.totalorder %s156, %s158
      %p162 = scmp.eq.s32.totalorder %s17, 0
      %p163 = por %p161, %p162
      %p164 = scmp.ne.s32.totalorder %s156, %s158
      %p165 = scmp.eq.s32.totalorder %s22, 1
      %p166 = por %p164, %p165
      %p167 = scmp.ne.s32.totalorder %s158, %s159
      %p168 = scmp.eq.s32.totalorder %s22, 0
      %p169 = por %p167, %p168
      %p170 = scmp.ne.s32.totalorder %s158, %s159
      %p171 = scmp.eq.s32.totalorder %s23, 1
      %p172 = por %p170, %p171
      %p174 = scmp.ne.s32.totalorder %s159, %s173
      %p175 = scmp.eq.s32.totalorder %s23, 0
      %p176 = por %p174, %p175
      %s178 = sadd.s32 %s177, 1
      %p181 = scmp.eq.s32.totalorder %s17, 1
      %p182 = scmp.ne.s32.totalorder %s177, %s179
      %p183 = scmp.eq.s32.totalorder %s17, 0
      %p184 = por %p182, %p183
      %p185 = scmp.ne.s32.totalorder %s177, %s179
      %p186 = scmp.eq.s32.totalorder %s22, 1
      %p187 = por %p185, %p186
      %p188 = scmp.ne.s32.totalorder %s179, %s180
      %p189 = scmp.eq.s32.totalorder %s22, 0
      %p190 = por %p188, %p189
      %p191 = scmp.ne.s32.totalorder %s179, %s180
      %p192 = scmp.eq.s32.totalorder %s23, 1
      %p193 = por %p191, %p192
      %p195 = scmp.ne.s32.totalorder %s180, %s194
      %p196 = scmp.eq.s32.totalorder %s23, 0
      %p197 = por %p195, %p196
      %s198 = ssub.s32 %s17, %s24
      %p199 = scmp.eq.s32.totalorder %s198, 0
      %s201 = sadd.s32 %s200, 1
      %s202 = scalar_select %p199, %s200, %s201
      %p205 = pneg %p199
      %p206 = scmp.eq.s32.totalorder %s17, 1
      %p207 = por %p205, %p206
      %p208 = scmp.ne.s32.totalorder %s200, %s203
      %p209 = scmp.eq.s32.totalorder %s17, 0
      %p210 = por %p208, %p209
      %p211 = scmp.ne.s32.totalorder %s200, %s203
      %p212 = scmp.eq.s32.totalorder %s22, 1
      %p213 = por %p211, %p212
      %p214 = scmp.ne.s32.totalorder %s203, %s204
      %p215 = scmp.eq.s32.totalorder %s22, 0
      %p216 = por %p214, %p215
      %p217 = scmp.ne.s32.totalorder %s203, %s204
      %p218 = scmp.eq.s32.totalorder %s23, 1
      %p219 = por %p217, %p218
      %p221 = scmp.ne.s32.totalorder %s204, %s220
      %p222 = scmp.eq.s32.totalorder %s23, 0
      %p223 = por %p221, %p222
      %p224 = scmp.le.s32.totalorder 1, %s17
      %p225 = scmp.lt.s32.totalorder %s17, 3
      %p226 = pnand %p224, %p225
      %p227 = pneg %p226
      // Predicated region
      $region9: #{tpu_custom_call.1} parent=5 // pred_check
        _
      $region10: #{tpu_custom_call.1} parent=5 // pred_check_branch
        %229 = sbr.rel (%p226) target = $region12
      $region11: #{tpu_custom_call.1} parent=5 // pred_region
        %s230 = ssub.s32 %s17, 1
        // Predicated region
        $region13: #{tpu_custom_call.1} parent=11 // pred_check
          %p231 = pneg %p64
        $region14: #{tpu_custom_call.1} parent=11 // pred_check_branch
          %233 = sbr.rel (%p231) target = $region16
        $region15: #{tpu_custom_call.1} parent=11 // pred_region
          _
        $region16: #{tpu_custom_call.1} parent=11 // pred_fallthru
          _
        // Predicated region
        $region17: #{tpu_custom_call.1} parent=11 // pred_check
          %p234 = pneg %p85
        $region18: #{tpu_custom_call.1} parent=11 // pred_check_branch
          %236 = sbr.rel (%p234) target = $region20
        $region19: #{tpu_custom_call.1} parent=11 // pred_region
          _
        $region20: #{tpu_custom_call.1} parent=11 // pred_fallthru
          _
        // Predicated region
        $region21: #{tpu_custom_call.1} parent=11 // pred_check
          %p237 = pneg %p106
        $region22: #{tpu_custom_call.1} parent=11 // pred_check_branch
          %239 = sbr.rel (%p237) target = $region24
        $region23: #{tpu_custom_call.1} parent=11 // pred_region
          %s241 = ssub.s32 24576, 24576
          %242 = vsyncadd [#allocation4], %s241
          %s243 = sshll.u32 [#allocation3], 4
          %s244 = int_to_ptr.vmem [resolvable:$true] %s243
          %249 = dma.hbm_to_vmem [thread:$0]  %s3, 24576, %s244, [#allocation4], 384, 384, 24
        $region24: #{tpu_custom_call.1} parent=11 // pred_fallthru
          _
        // Predicated region
        $region25: #{tpu_custom_call.1} parent=11 // pred_check
          %p250 = pneg %p127
        $region26: #{tpu_custom_call.1} parent=11 // pred_check_branch
          %252 = sbr.rel (%p250) target = $region28
        $region27: #{tpu_custom_call.1} parent=11 // pred_region
          _
        $region28: #{tpu_custom_call.1} parent=11 // pred_fallthru
          _
        // Predicated region
        $region29: #{tpu_custom_call.1} parent=11 // pred_check
          %p253 = pneg %p148
        $region30: #{tpu_custom_call.1} parent=11 // pred_check_branch
          %255 = sbr.rel (%p253) target = $region32
        $region31: #{tpu_custom_call.1} parent=11 // pred_region
          _
        $region32: #{tpu_custom_call.1} parent=11 // pred_fallthru
          _
        // Predicated region
        $region33: #{tpu_custom_call.1} parent=11 // pred_check
          %p256 = pneg %p169
        $region34: #{tpu_custom_call.1} parent=11 // pred_check_branch
          %258 = sbr.rel (%p256) target = $region36
        $region35: #{tpu_custom_call.1} parent=11 // pred_region
          _
        $region36: #{tpu_custom_call.1} parent=11 // pred_fallthru
          _
        // Predicated region
        $region37: #{tpu_custom_call.1} parent=11 // pred_check
          %p259 = pneg %p190
        $region38: #{tpu_custom_call.1} parent=11 // pred_check_branch
          %261 = sbr.rel (%p259) target = $region40
        $region39: #{tpu_custom_call.1} parent=11 // pred_region
          _
        $region40: #{tpu_custom_call.1} parent=11 // pred_fallthru
          _
      $region12: #{tpu_custom_call.1} parent=5 // pred_fallthru
        _
      %p262 = scmp.lt.s32.totalorder %s17, 2
      // Predicated region
      $region41: #{tpu_custom_call.1} parent=5 // pred_check
        %p263 = pneg %p262
      $region42: #{tpu_custom_call.1} parent=5 // pred_check_branch
        %265 = sbr.rel (%p263) target = $region44
      $region43: #{tpu_custom_call.1} parent=5 // pred_region
        // Predicated region
        $region45: #{tpu_custom_call.1} parent=43 // pred_check
          %p266 = pneg %p37
        $region46: #{tpu_custom_call.1} parent=43 // pred_check_branch
          %268 = sbr.rel (%p266) target = $region48
        $region47: #{tpu_custom_call.1} parent=43 // pred_region
          %p269 = scmp.lt.s32.totalorder %s17, 1
          %s270 = scalar_select %p269, %s17, 1
          %s271 = smul.addr %s270, 8
          %s272 = scalar_lea.vmem %s0, %s271
        $region48: #{tpu_custom_call.1} parent=43 // pred_fallthru
          _
      $region44: #{tpu_custom_call.1} parent=5 // pred_fallthru
        _
      %p273 = scmp.le.s32.totalorder 1, %s17
      %p274 = scmp.lt.s32.totalorder %s17, 3
      %p275 = pnand %p273, %p274
      %p276 = pneg %p275
      // Predicated region
      $region49: #{tpu_custom_call.1} parent=5 // pred_check
        _
      $region50: #{tpu_custom_call.1} parent=5 // pred_check_branch
        %278 = sbr.rel (%p275) target = $region52
      $region51: #{tpu_custom_call.1} parent=5 // pred_region
        %s279 = ssub.s32 %s17, 1
        // Predicated region
        $region53: #{tpu_custom_call.1} parent=51 // pred_check
          %p280 = pneg %p106
        $region54: #{tpu_custom_call.1} parent=51 // pred_check_branch
          %282 = sbr.rel (%p280) target = $region56
        $region55: #{tpu_custom_call.1} parent=51 // pred_region
          %283 = dma.done [#allocation4], 24576
        $region56: #{tpu_custom_call.1} parent=51 // pred_fallthru
          _
        %p284 = scmp.lt.s32.totalorder %s22, 1
        %s285 = scalar_select %p284, %s22, 1
        %s286 = smul.addr %s285, 8
        %s287 = scalar_lea.vmem %s0, %s286
        %p288 = pneg %p43
        %p289 = pneg %p40
        %p290 = pneg %p64
        %p291 = pneg %p61
        %p292 = pneg %p85
        %p293 = pneg %p82
        %p294 = pneg %p106
        %p295 = pneg %p103
        %p296 = pneg %p127
        %p297 = pneg %p124
        %p298 = pneg %p148
        %p299 = pneg %p145
        %p300 = pneg %p169
        %p301 = pneg %p166
        %p302 = pneg %p190
        %p303 = pneg %p187
        %p304 = pneg %p216
        %p305 = pneg %p213
        %p306 = scmp.lt.s32.totalorder %s22, 1
        %s307 = scalar_select %p306, %s22, 1
        %s308 = smul.addr %s307, 8
        %s309 = scalar_lea.vmem %s8, %s308
        %p310 = scmp.lt.s32.totalorder %s22, 1
        %s311 = scalar_select %p310, %s22, 1
        %s312 = smul.addr %s311, 8
        %s313 = scalar_lea.vmem %s0, %s312
        %p314 = scmp.lt.s32.totalorder %s22, 1
        %s315 = scalar_select %p314, %s22, 1
        %s316 = smul.addr %s315, 8
        %s317 = scalar_lea.vmem %s8, %s316
        %v318 = vld [vmem:[%s313] sm:$0xff]
        %v319 = vld [vmem:[%s1] sm:$0xf]
        %321 = vset.pattern.permute.xlu0 0
        %322 = vperm.xlu0 %321, %v318
        %v323 = vpop.permute.xlu0 %322
        %v326 = vlaneseq
        %v327 = vshrl.u32 %v326, 7
        %v328 = vsub.s32 0, %v327
        %v329 = vrot.slane %v319, %v328
        %v330 = vlaneseq
        %v331 = vshrl.u32 %v330, 7
        %v332 = vsub.s32 1, %v331
        %v333 = vrot.slane %v319, %v332
        %v334 = vlaneseq
        %v335 = vshrl.u32 %v334, 7
        %v336 = vsub.s32 2, %v335
        %v337 = vrot.slane %v319, %v336
        %v338 = vlaneseq
        %v339 = vshrl.u32 %v338, 7
        %v340 = vsub.s32 3, %v339
        %v341 = vrot.slane %v319, %v340
        %v346 = vmul.f32 %v323, %v329
        %v347 = vmul.f32 %v323, %v333
        %v348 = vmul.f32 %v323, %v337
        %v349 = vmul.f32 %v323, %v341
        %v350 = vld [vmem:[%s2] sm:$0xf]
        %v352 = vlaneseq
        %v353 = vshrl.u32 %v352, 7
        %v354 = vsub.s32 0, %v353
        %v355 = vrot.slane %v350, %v354
        %v356 = vlaneseq
        %v357 = vshrl.u32 %v356, 7
        %v358 = vsub.s32 1, %v357
        %v359 = vrot.slane %v350, %v358
        %v360 = vlaneseq
        %v361 = vshrl.u32 %v360, 7
        %v362 = vsub.s32 2, %v361
        %v363 = vrot.slane %v350, %v362
        %v364 = vlaneseq
        %v365 = vshrl.u32 %v364, 7
        %v366 = vsub.s32 3, %v365
        %v367 = vrot.slane %v350, %v366
        %v372 = vadd.f32 %v346, %v355
        %v373 = vadd.f32 %v347, %v359
        %v374 = vadd.f32 %v348, %v363
        %v375 = vadd.f32 %v349, %v367
        %v376 = vmax.f32 %v372, 0.0
        %v377 = vmax.f32 %v373, 0.0
        %v378 = vmax.f32 %v374, 0.0
        %v379 = vmax.f32 %v375, 0.0
        %v380 = vld [vmem:[#allocation3] sm:$0xff]
        %v381 = vld [vmem:[#allocation3 + $0x8] sm:$0xff]
        %v382 = vld [vmem:[#allocation3 + $0x10] sm:$0xff]
        %v383 = vld [vmem:[#allocation3 + $0x18] sm:$0xff]
        %v384 = vld [vmem:[#allocation3 + $0x20] sm:$0xff]
        %v385 = vld [vmem:[#allocation3 + $0x28] sm:$0xff]
        %v386 = vld [vmem:[#allocation3 + $0x30] sm:$0xff]
        %v387 = vld [vmem:[#allocation3 + $0x38] sm:$0xff]
        %v388 = vld [vmem:[#allocation3 + $0x40] sm:$0xff]
        %v389 = vld [vmem:[#allocation3 + $0x48] sm:$0xff]
        %v390 = vld [vmem:[#allocation3 + $0x50] sm:$0xff]
        %v391 = vld [vmem:[#allocation3 + $0x58] sm:$0xff]
        %v392 = vld [vmem:[#allocation3 + $0x60] sm:$0xff]
        %v393 = vld [vmem:[#allocation3 + $0x68] sm:$0xff]
        %v394 = vld [vmem:[#allocation3 + $0x70] sm:$0xff]
        %v395 = vld [vmem:[#allocation3 + $0x78] sm:$0xff]
        %v396 = vld [vmem:[#allocation3 + $0x80] sm:$0xff]
        %v397 = vld [vmem:[#allocation3 + $0x88] sm:$0xff]
        %v398 = vld [vmem:[#allocation3 + $0x90] sm:$0xff]
        %v399 = vld [vmem:[#allocation3 + $0x98] sm:$0xff]
        %v400 = vld [vmem:[#allocation3 + $0xa0] sm:$0xff]
        %v401 = vld [vmem:[#allocation3 + $0xa8] sm:$0xff]
        %v402 = vld [vmem:[#allocation3 + $0xb0] sm:$0xff]
        %v403 = vld [vmem:[#allocation3 + $0xb8] sm:$0xff]
        %v404 = vld [vmem:[#allocation3 + $0xc0] sm:$0xff]
        %v405 = vld [vmem:[#allocation3 + $0xc8] sm:$0xff]
        %v406 = vld [vmem:[#allocation3 + $0xd0] sm:$0xff]
        %v407 = vld [vmem:[#allocation3 + $0xd8] sm:$0xff]
        %v408 = vld [vmem:[#allocation3 + $0xe0] sm:$0xff]
        %v409 = vld [vmem:[#allocation3 + $0xe8] sm:$0xff]
        %v410 = vld [vmem:[#allocation3 + $0xf0] sm:$0xff]
        %v411 = vld [vmem:[#allocation3 + $0xf8] sm:$0xff]
        %v412 = vld [vmem:[#allocation3 + $0x100] sm:$0xff]
        %v413 = vld [vmem:[#allocation3 + $0x108] sm:$0xff]
        %v414 = vld [vmem:[#allocation3 + $0x110] sm:$0xff]
        %v415 = vld [vmem:[#allocation3 + $0x118] sm:$0xff]
        %v416 = vld [vmem:[#allocation3 + $0x120] sm:$0xff]
        %v417 = vld [vmem:[#allocation3 + $0x128] sm:$0xff]
        %v418 = vld [vmem:[#allocation3 + $0x130] sm:$0xff]
        %v419 = vld [vmem:[#allocation3 + $0x138] sm:$0xff]
        %v420 = vld [vmem:[#allocation3 + $0x140] sm:$0xff]
        %v421 = vld [vmem:[#allocation3 + $0x148] sm:$0xff]
        %v422 = vld [vmem:[#allocation3 + $0x150] sm:$0xff]
        %v423 = vld [vmem:[#allocation3 + $0x158] sm:$0xff]
        %v424 = vld [vmem:[#allocation3 + $0x160] sm:$0xff]
        %v425 = vld [vmem:[#allocation3 + $0x168] sm:$0xff]
        %v426 = vld [vmem:[#allocation3 + $0x170] sm:$0xff]
        %v427 = vld [vmem:[#allocation3 + $0x178] sm:$0xff]
        %v428 = vld [vmem:[#allocation3 + $0x180] sm:$0xff]
        %v429 = vld [vmem:[#allocation3 + $0x188] sm:$0xff]
        %v430 = vld [vmem:[#allocation3 + $0x190] sm:$0xff]
        %v431 = vld [vmem:[#allocation3 + $0x198] sm:$0xff]
        %v432 = vld [vmem:[#allocation3 + $0x1a0] sm:$0xff]
        %v433 = vld [vmem:[#allocation3 + $0x1a8] sm:$0xff]
        %v434 = vld [vmem:[#allocation3 + $0x1b0] sm:$0xff]
        %v435 = vld [vmem:[#allocation3 + $0x1b8] sm:$0xff]
        %v436 = vld [vmem:[#allocation3 + $0x1c0] sm:$0xff]
        %v437 = vld [vmem:[#allocation3 + $0x1c8] sm:$0xff]
        %v438 = vld [vmem:[#allocation3 + $0x1d0] sm:$0xff]
        %v439 = vld [vmem:[#allocation3 + $0x1d8] sm:$0xff]
        %v440 = vld [vmem:[#allocation3 + $0x1e0] sm:$0xff]
        %v441 = vld [vmem:[#allocation3 + $0x1e8] sm:$0xff]
        %v442 = vld [vmem:[#allocation3 + $0x1f0] sm:$0xff]
        %v443 = vld [vmem:[#allocation3 + $0x1f8] sm:$0xff]
        %v444 = vld [vmem:[#allocation3 + $0x200] sm:$0xff]
        %v445 = vld [vmem:[#allocation3 + $0x208] sm:$0xff]
        %v446 = vld [vmem:[#allocation3 + $0x210] sm:$0xff]
        %v447 = vld [vmem:[#allocation3 + $0x218] sm:$0xff]
        %v448 = vld [vmem:[#allocation3 + $0x220] sm:$0xff]
        %v449 = vld [vmem:[#allocation3 + $0x228] sm:$0xff]
        %v450 = vld [vmem:[#allocation3 + $0x230] sm:$0xff]
        %v451 = vld [vmem:[#allocation3 + $0x238] sm:$0xff]
        %v452 = vld [vmem:[#allocation3 + $0x240] sm:$0xff]
        %v453 = vld [vmem:[#allocation3 + $0x248] sm:$0xff]
        %v454 = vld [vmem:[#allocation3 + $0x250] sm:$0xff]
        %v455 = vld [vmem:[#allocation3 + $0x258] sm:$0xff]
        %v456 = vld [vmem:[#allocation3 + $0x260] sm:$0xff]
        %v457 = vld [vmem:[#allocation3 + $0x268] sm:$0xff]
        %v458 = vld [vmem:[#allocation3 + $0x270] sm:$0xff]
        %v459 = vld [vmem:[#allocation3 + $0x278] sm:$0xff]
        %v460 = vld [vmem:[#allocation3 + $0x280] sm:$0xff]
        %v461 = vld [vmem:[#allocation3 + $0x288] sm:$0xff]
        %v462 = vld [vmem:[#allocation3 + $0x290] sm:$0xff]
        %v463 = vld [vmem:[#allocation3 + $0x298] sm:$0xff]
        %v464 = vld [vmem:[#allocation3 + $0x2a0] sm:$0xff]
        %v465 = vld [vmem:[#allocation3 + $0x2a8] sm:$0xff]
        %v466 = vld [vmem:[#allocation3 + $0x2b0] sm:$0xff]
        %v467 = vld [vmem:[#allocation3 + $0x2b8] sm:$0xff]
        %v468 = vld [vmem:[#allocation3 + $0x2c0] sm:$0xff]
        %v469 = vld [vmem:[#allocation3 + $0x2c8] sm:$0xff]
        %v470 = vld [vmem:[#allocation3 + $0x2d0] sm:$0xff]
        %v471 = vld [vmem:[#allocation3 + $0x2d8] sm:$0xff]
        %v472 = vld [vmem:[#allocation3 + $0x2e0] sm:$0xff]
        %v473 = vld [vmem:[#allocation3 + $0x2e8] sm:$0xff]
        %v474 = vld [vmem:[#allocation3 + $0x2f0] sm:$0xff]
        %v475 = vld [vmem:[#allocation3 + $0x2f8] sm:$0xff]
        %v476 = vld [vmem:[#allocation3 + $0x300] sm:$0xff]
        %v477 = vld [vmem:[#allocation3 + $0x308] sm:$0xff]
        %v478 = vld [vmem:[#allocation3 + $0x310] sm:$0xff]
        %v479 = vld [vmem:[#allocation3 + $0x318] sm:$0xff]
        %v480 = vld [vmem:[#allocation3 + $0x320] sm:$0xff]
        %v481 = vld [vmem:[#allocation3 + $0x328] sm:$0xff]
        %v482 = vld [vmem:[#allocation3 + $0x330] sm:$0xff]
        %v483 = vld [vmem:[#allocation3 + $0x338] sm:$0xff]
        %v484 = vld [vmem:[#allocation3 + $0x340] sm:$0xff]
        %v485 = vld [vmem:[#allocation3 + $0x348] sm:$0xff]
        %v486 = vld [vmem:[#allocation3 + $0x350] sm:$0xff]
        %v487 = vld [vmem:[#allocation3 + $0x358] sm:$0xff]
        %v488 = vld [vmem:[#allocation3 + $0x360] sm:$0xff]
        %v489 = vld [vmem:[#allocation3 + $0x368] sm:$0xff]
        %v490 = vld [vmem:[#allocation3 + $0x370] sm:$0xff]
        %v491 = vld [vmem:[#allocation3 + $0x378] sm:$0xff]
        %v492 = vld [vmem:[#allocation3 + $0x380] sm:$0xff]
        %v493 = vld [vmem:[#allocation3 + $0x388] sm:$0xff]
        %v494 = vld [vmem:[#allocation3 + $0x390] sm:$0xff]
        %v495 = vld [vmem:[#allocation3 + $0x398] sm:$0xff]
        %v496 = vld [vmem:[#allocation3 + $0x3a0] sm:$0xff]
        %v497 = vld [vmem:[#allocation3 + $0x3a8] sm:$0xff]
        %v498 = vld [vmem:[#allocation3 + $0x3b0] sm:$0xff]
        %v499 = vld [vmem:[#allocation3 + $0x3b8] sm:$0xff]
        %v500 = vld [vmem:[#allocation3 + $0x3c0] sm:$0xff]
        %v501 = vld [vmem:[#allocation3 + $0x3c8] sm:$0xff]
        %v502 = vld [vmem:[#allocation3 + $0x3d0] sm:$0xff]
        %v503 = vld [vmem:[#allocation3 + $0x3d8] sm:$0xff]
        %v504 = vld [vmem:[#allocation3 + $0x3e0] sm:$0xff]
        %v505 = vld [vmem:[#allocation3 + $0x3e8] sm:$0xff]
        %v506 = vld [vmem:[#allocation3 + $0x3f0] sm:$0xff]
        %v507 = vld [vmem:[#allocation3 + $0x3f8] sm:$0xff]
        %v508 = vld [vmem:[#allocation3 + $0x400] sm:$0xff]
        %v509 = vld [vmem:[#allocation3 + $0x408] sm:$0xff]
        %v510 = vld [vmem:[#allocation3 + $0x410] sm:$0xff]
        %v511 = vld [vmem:[#allocation3 + $0x418] sm:$0xff]
        %v512 = vld [vmem:[#allocation3 + $0x420] sm:$0xff]
        %v513 = vld [vmem:[#allocation3 + $0x428] sm:$0xff]
        %v514 = vld [vmem:[#allocation3 + $0x430] sm:$0xff]
        %v515 = vld [vmem:[#allocation3 + $0x438] sm:$0xff]
        %v516 = vld [vmem:[#allocation3 + $0x440] sm:$0xff]
        %v517 = vld [vmem:[#allocation3 + $0x448] sm:$0xff]
        %v518 = vld [vmem:[#allocation3 + $0x450] sm:$0xff]
        %v519 = vld [vmem:[#allocation3 + $0x458] sm:$0xff]
        %v520 = vld [vmem:[#allocation3 + $0x460] sm:$0xff]
        %v521 = vld [vmem:[#allocation3 + $0x468] sm:$0xff]
        %v522 = vld [vmem:[#allocation3 + $0x470] sm:$0xff]
        %v523 = vld [vmem:[#allocation3 + $0x478] sm:$0xff]
        %v524 = vld [vmem:[#allocation3 + $0x480] sm:$0xff]
        %v525 = vld [vmem:[#allocation3 + $0x488] sm:$0xff]
        %v526 = vld [vmem:[#allocation3 + $0x490] sm:$0xff]
        %v527 = vld [vmem:[#allocation3 + $0x498] sm:$0xff]
        %v528 = vld [vmem:[#allocation3 + $0x4a0] sm:$0xff]
        %v529 = vld [vmem:[#allocation3 + $0x4a8] sm:$0xff]
        %v530 = vld [vmem:[#allocation3 + $0x4b0] sm:$0xff]
        %v531 = vld [vmem:[#allocation3 + $0x4b8] sm:$0xff]
        %v532 = vld [vmem:[#allocation3 + $0x4c0] sm:$0xff]
        %v533 = vld [vmem:[#allocation3 + $0x4c8] sm:$0xff]
        %v534 = vld [vmem:[#allocation3 + $0x4d0] sm:$0xff]
        %v535 = vld [vmem:[#allocation3 + $0x4d8] sm:$0xff]
        %v536 = vld [vmem:[#allocation3 + $0x4e0] sm:$0xff]
        %v537 = vld [vmem:[#allocation3 + $0x4e8] sm:$0xff]
        %v538 = vld [vmem:[#allocation3 + $0x4f0] sm:$0xff]
        %v539 = vld [vmem:[#allocation3 + $0x4f8] sm:$0xff]
        %v540 = vld [vmem:[#allocation3 + $0x500] sm:$0xff]
        %v541 = vld [vmem:[#allocation3 + $0x508] sm:$0xff]
        %v542 = vld [vmem:[#allocation3 + $0x510] sm:$0xff]
        %v543 = vld [vmem:[#allocation3 + $0x518] sm:$0xff]
        %v544 = vld [vmem:[#allocation3 + $0x520] sm:$0xff]
        %v545 = vld [vmem:[#allocation3 + $0x528] sm:$0xff]
        %v546 = vld [vmem:[#allocation3 + $0x530] sm:$0xff]
        %v547 = vld [vmem:[#allocation3 + $0x538] sm:$0xff]
        %v548 = vld [vmem:[#allocation3 + $0x540] sm:$0xff]
        %v549 = vld [vmem:[#allocation3 + $0x548] sm:$0xff]
        %v550 = vld [vmem:[#allocation3 + $0x550] sm:$0xff]
        %v551 = vld [vmem:[#allocation3 + $0x558] sm:$0xff]
        %v552 = vld [vmem:[#allocation3 + $0x560] sm:$0xff]
        %v553 = vld [vmem:[#allocation3 + $0x568] sm:$0xff]
        %v554 = vld [vmem:[#allocation3 + $0x570] sm:$0xff]
        %v555 = vld [vmem:[#allocation3 + $0x578] sm:$0xff]
        %v556 = vld [vmem:[#allocation3 + $0x580] sm:$0xff]
        %v557 = vld [vmem:[#allocation3 + $0x588] sm:$0xff]
        %v558 = vld [vmem:[#allocation3 + $0x590] sm:$0xff]
        %v559 = vld [vmem:[#allocation3 + $0x598] sm:$0xff]
        %v560 = vld [vmem:[#allocation3 + $0x5a0] sm:$0xff]
        %v561 = vld [vmem:[#allocation3 + $0x5a8] sm:$0xff]
        %v562 = vld [vmem:[#allocation3 + $0x5b0] sm:$0xff]
        %v563 = vld [vmem:[#allocation3 + $0x5b8] sm:$0xff]
        %v564 = vld [vmem:[#allocation3 + $0x5c0] sm:$0xff]
        %v565 = vld [vmem:[#allocation3 + $0x5c8] sm:$0xff]
        %v566 = vld [vmem:[#allocation3 + $0x5d0] sm:$0xff]
        %v567 = vld [vmem:[#allocation3 + $0x5d8] sm:$0xff]
        %v568 = vld [vmem:[#allocation3 + $0x5e0] sm:$0xff]
        %v569 = vld [vmem:[#allocation3 + $0x5e8] sm:$0xff]
        %v570 = vld [vmem:[#allocation3 + $0x5f0] sm:$0xff]
        %v571 = vld [vmem:[#allocation3 + $0x5f8] sm:$0xff]
        %v572 = vld [vmem:[%s4] sm:$0x7]
        %573 = vset.pattern.permute.xlu0 1
        %574 = vperm.xlu0 %573, %v318
        %v575 = vpop.permute.xlu0 %574
        %v578 = vlaneseq
        %v579 = vshrl.u32 %v578, 7
        %v580 = vsub.s32 0, %v579
        %v581 = vrot.slane %v572, %v580
        %v582 = vlaneseq
        %v583 = vshrl.u32 %v582, 7
        %v584 = vsub.s32 1, %v583
        %v585 = vrot.slane %v572, %v584
        %v586 = vlaneseq
        %v587 = vshrl.u32 %v586, 7
        %v588 = vsub.s32 2, %v587
        %v589 = vrot.slane %v572, %v588
        %v593 = vmul.f32 %v575, %v581
        %v594 = vmul.f32 %v575, %v585
        %v595 = vmul.f32 %v575, %v589
        %596 = vmatprep.subr.mxu0 %v426
        %597 = vmatpush1.msra.mxu0 %v425
        %598 = vmatprep.subr.mxu0 %v423
        %599 = vmatpush1.msra.mxu0 %v422
        %600 = vmatprep.subr.mxu0 %v420
        %601 = vmatpush1.msra.mxu0 %v419
        %602 = vmatprep.subr.mxu0 %v417
        %603 = vmatpush1.msra.mxu0 %v416
        %604 = vmatprep.subr.mxu0 %v414
        %605 = vmatpush1.msra.mxu0 %v413
        %606 = vmatprep.subr.mxu0 %v411
        %607 = vmatpush1.msra.mxu0 %v410
        %608 = vmatprep.subr.mxu0 %v408
        %609 = vmatpush1.msra.mxu0 %v407
        %610 = vmatprep.subr.mxu0 %v405
        %611 = vmatpush1.msra.mxu0 %v404
        %612 = vmatprep.subr.mxu0 %v402
        %613 = vmatpush1.msra.mxu0 %v401
        %614 = vmatprep.subr.mxu0 %v399
        %615 = vmatpush1.msra.mxu0 %v398
        %616 = vmatprep.subr.mxu0 %v396
        %617 = vmatpush1.msra.mxu0 %v395
        %618 = vmatprep.subr.mxu0 %v393
        %619 = vmatpush1.msra.mxu0 %v392
        %620 = vmatprep.subr.mxu0 %v390
        %621 = vmatpush1.msra.mxu0 %v389
        %622 = vmatprep.subr.mxu0 %v387
        %623 = vmatpush1.msra.mxu0 %v386
        %624 = vmatprep.subr.mxu0 %v384
        %625 = vmatpush1.msra.mxu0 %v383
        %626 = vmatprep.subr.mxu0 %v381
        %627 = vmatpush1.msra.mxu0 %v380
        %628 = vmatprep.subr.mxu0 %v474
        %629 = vmatpush2.msra.mxu0 %v473
        %630 = vmatprep.subr.mxu0 %v471
        %631 = vmatpush2.msra.mxu0 %v470
        %632 = vmatprep.subr.mxu0 %v468
        %633 = vmatpush2.msra.mxu0 %v467
        %634 = vmatprep.subr.mxu0 %v465
        %635 = vmatpush2.msra.mxu0 %v464
        %636 = vmatprep.subr.mxu0 %v462
        %637 = vmatpush2.msra.mxu0 %v461
        %638 = vmatprep.subr.mxu0 %v459
        %639 = vmatpush2.msra.mxu0 %v458
        %640 = vmatprep.subr.mxu0 %v456
        %641 = vmatpush2.msra.mxu0 %v455
        %642 = vmatprep.subr.mxu0 %v453
        %643 = vmatpush2.msra.mxu0 %v452
        %644 = vmatprep.subr.mxu0 %v450
        %645 = vmatpush2.msra.mxu0 %v449
        %646 = vmatprep.subr.mxu0 %v447
        %647 = vmatpush2.msra.mxu0 %v446
        %648 = vmatprep.subr.mxu0 %v444
        %649 = vmatpush2.msra.mxu0 %v443
        %650 = vmatprep.subr.mxu0 %v441
        %651 = vmatpush2.msra.mxu0 %v440
        %652 = vmatprep.subr.mxu0 %v438
        %653 = vmatpush2.msra.mxu0 %v437
        %654 = vmatprep.subr.mxu0 %v435
        %655 = vmatpush2.msra.mxu0 %v434
        %656 = vmatprep.subr.mxu0 %v432
        %657 = vmatpush2.msra.mxu0 %v431
        %658 = vmatprep.subr.mxu0 %v429
        %659 = vmatpush2.msra.mxu0 %v428
        %660 = vmatprep.mubr.f32.mxu0 %v377
        %661 = vmatmul.mubr.f32.gmra.mxu0 %v376
        %v662 = vpop.f32.mrf.mxu0
        %v663 = vadd.f32 %v593, %v662
        %v664 = vpop.f32.mrf.mxu0
        %v665 = vadd.f32 %v594, %v664
        %666 = vdwg.mxu0
        %667 = vmatprep.subr.mxu0 %v522
        %668 = vmatpush1.msra.mxu0 %v521
        %669 = vmatprep.subr.mxu0 %v519
        %670 = vmatpush1.msra.mxu0 %v518
        %671 = vmatprep.subr.mxu0 %v516
        %672 = vmatpush1.msra.mxu0 %v515
        %673 = vmatprep.subr.mxu0 %v513
        %674 = vmatpush1.msra.mxu0 %v512
        %675 = vmatprep.subr.mxu0 %v510
        %676 = vmatpush1.msra.mxu0 %v509
        %677 = vmatprep.subr.mxu0 %v507
        %678 = vmatpush1.msra.mxu0 %v506
        %679 = vmatprep.subr.mxu0 %v504
        %680 = vmatpush1.msra.mxu0 %v503
        %681 = vmatprep.subr.mxu0 %v501
        %682 = vmatpush1.msra.mxu0 %v500
        %683 = vmatprep.subr.mxu0 %v498
        %684 = vmatpush1.msra.mxu0 %v497
        %685 = vmatprep.subr.mxu0 %v495
        %686 = vmatpush1.msra.mxu0 %v494
        %687 = vmatprep.subr.mxu0 %v492
        %688 = vmatpush1.msra.mxu0 %v491
        %689 = vmatprep.subr.mxu0 %v489
        %690 = vmatpush1.msra.mxu0 %v488
        %691 = vmatprep.subr.mxu0 %v486
        %692 = vmatpush1.msra.mxu0 %v485
        %693 = vmatprep.subr.mxu0 %v483
        %694 = vmatpush1.msra.mxu0 %v482
        %695 = vmatprep.subr.mxu0 %v480
        %696 = vmatpush1.msra.mxu0 %v479
        %697 = vmatprep.subr.mxu0 %v477
        %698 = vmatpush1.msra.mxu0 %v476
        %699 = vmatprep.subr.mxu0 %v570
        %700 = vmatpush2.msra.mxu0 %v569
        %701 = vmatprep.subr.mxu0 %v567
        %702 = vmatpush2.msra.mxu0 %v566
        %703 = vmatprep.subr.mxu0 %v564
        %704 = vmatpush2.msra.mxu0 %v563
        %705 = vmatprep.subr.mxu0 %v561
        %706 = vmatpush2.msra.mxu0 %v560
        %707 = vmatprep.subr.mxu0 %v558
        %708 = vmatpush2.msra.mxu0 %v557
        %709 = vmatprep.subr.mxu0 %v555
        %710 = vmatpush2.msra.mxu0 %v554
        %711 = vmatprep.subr.mxu0 %v552
        %712 = vmatpush2.msra.mxu0 %v551
        %713 = vmatprep.subr.mxu0 %v549
        %714 = vmatpush2.msra.mxu0 %v548
        %715 = vmatprep.subr.mxu0 %v546
        %716 = vmatpush2.msra.mxu0 %v545
        %717 = vmatprep.subr.mxu0 %v543
        %718 = vmatpush2.msra.mxu0 %v542
        %719 = vmatprep.subr.mxu0 %v540
        %720 = vmatpush2.msra.mxu0 %v539
        %721 = vmatprep.subr.mxu0 %v537
        %722 = vmatpush2.msra.mxu0 %v536
        %723 = vmatprep.subr.mxu0 %v534
        %724 = vmatpush2.msra.mxu0 %v533
        %725 = vmatprep.subr.mxu0 %v531
        %726 = vmatpush2.msra.mxu0 %v530
        %727 = vmatprep.subr.mxu0 %v528
        %728 = vmatpush2.msra.mxu0 %v527
        %729 = vmatprep.subr.mxu0 %v525
        %730 = vmatpush2.msra.mxu0 %v524
        %731 = vmatprep.mubr.f32.mxu0 %v379
        %732 = vmatmul.mubr.f32.gmra.mxu0 %v378
        %v733 = vpop.f32.mrf.mxu0
        %v734 = vadd.f32 %v663, %v733
        %v735 = vpop.f32.mrf.mxu0
        %v736 = vadd.f32 %v665, %v735
        %737 = vdwg.mxu0
        %738 = vmatprep.subr.mxu0 0.0
        %739 = vmatpush1.msra.mxu0 %v427
        %740 = vmatprep.subr.mxu0 0.0
        %741 = vmatpush1.msra.mxu0 %v424
        %742 = vmatprep.subr.mxu0 0.0
        %743 = vmatpush1.msra.mxu0 %v421
        %744 = vmatprep.subr.mxu0 0.0
        %745 = vmatpush1.msra.mxu0 %v418
        %746 = vmatprep.subr.mxu0 0.0
        %747 = vmatpush1.msra.mxu0 %v415
        %748 = vmatprep.subr.mxu0 0.0
        %749 = vmatpush1.msra.mxu0 %v412
        %750 = vmatprep.subr.mxu0 0.0
        %751 = vmatpush1.msra.mxu0 %v409
        %752 = vmatprep.subr.mxu0 0.0
        %753 = vmatpush1.msra.mxu0 %v406
        %754 = vmatprep.subr.mxu0 0.0
        %755 = vmatpush1.msra.mxu0 %v403
        %756 = vmatprep.subr.mxu0 0.0
        %757 = vmatpush1.msra.mxu0 %v400
        %758 = vmatprep.subr.mxu0 0.0
        %759 = vmatpush1.msra.mxu0 %v397
        %760 = vmatprep.subr.mxu0 0.0
        %761 = vmatpush1.msra.mxu0 %v394
        %762 = vmatprep.subr.mxu0 0.0
        %763 = vmatpush1.msra.mxu0 %v391
        %764 = vmatprep.subr.mxu0 0.0
        %765 = vmatpush1.msra.mxu0 %v388
        %766 = vmatprep.subr.mxu0 0.0
        %767 = vmatpush1.msra.mxu0 %v385
        %768 = vmatprep.subr.mxu0 0.0
        %769 = vmatpush1.msra.mxu0 %v382
        %770 = vmatprep.subr.mxu0 0.0
        %771 = vmatpush2.msra.mxu0 %v475
        %772 = vmatprep.subr.mxu0 0.0
        %773 = vmatpush2.msra.mxu0 %v472
        %774 = vmatprep.subr.mxu0 0.0
        %775 = vmatpush2.msra.mxu0 %v469
        %776 = vmatprep.subr.mxu0 0.0
        %777 = vmatpush2.msra.mxu0 %v466
        %778 = vmatprep.subr.mxu0 0.0
        %779 = vmatpush2.msra.mxu0 %v463
        %780 = vmatprep.subr.mxu0 0.0
        %781 = vmatpush2.msra.mxu0 %v460
        %782 = vmatprep.subr.mxu0 0.0
        %783 = vmatpush2.msra.mxu0 %v457
        %784 = vmatprep.subr.mxu0 0.0
        %785 = vmatpush2.msra.mxu0 %v454
        %786 = vmatprep.subr.mxu0 0.0
        %787 = vmatpush2.msra.mxu0 %v451
        %788 = vmatprep.subr.mxu0 0.0
        %789 = vmatpush2.msra.mxu0 %v448
        %790 = vmatprep.subr.mxu0 0.0
        %791 = vmatpush2.msra.mxu0 %v445
        %792 = vmatprep.subr.mxu0 0.0
        %793 = vmatpush2.msra.mxu0 %v442
        %794 = vmatprep.subr.mxu0 0.0
        %795 = vmatpush2.msra.mxu0 %v439
        %796 = vmatprep.subr.mxu0 0.0
        %797 = vmatpush2.msra.mxu0 %v436
        %798 = vmatprep.subr.mxu0 0.0
        %799 = vmatpush2.msra.mxu0 %v433
        %800 = vmatprep.subr.mxu0 0.0
        %801 = vmatpush2.msra.mxu0 %v430
        %802 = vmatprep.mubr.f32.mxu0 %v377
        %803 = vmatmul.mubr.f32.gmra.mxu0 %v376
        %v804 = vpop.f32.mrf.mxu0
        %v805 = vadd.f32 %v595, %v804
        %v806 = vpop.f32.mrf.mxu0
        %807 = vdwg.mxu0
        %808 = vmatprep.subr.mxu0 0.0
        %809 = vmatpush1.msra.mxu0 %v523
        %810 = vmatprep.subr.mxu0 0.0
        %811 = vmatpush1.msra.mxu0 %v520
        %812 = vmatprep.subr.mxu0 0.0
        %813 = vmatpush1.msra.mxu0 %v517
        %814 = vmatprep.subr.mxu0 0.0
        %815 = vmatpush1.msra.mxu0 %v514
        %816 = vmatprep.subr.mxu0 0.0
        %817 = vmatpush1.msra.mxu0 %v511
        %818 = vmatprep.subr.mxu0 0.0
        %819 = vmatpush1.msra.mxu0 %v508
        %820 = vmatprep.subr.mxu0 0.0
        %821 = vmatpush1.msra.mxu0 %v505
        %822 = vmatprep.subr.mxu0 0.0
        %823 = vmatpush1.msra.mxu0 %v502
        %824 = vmatprep.subr.mxu0 0.0
        %825 = vmatpush1.msra.mxu0 %v499
        %826 = vmatprep.subr.mxu0 0.0
        %827 = vmatpush1.msra.mxu0 %v496
        %828 = vmatprep.subr.mxu0 0.0
        %829 = vmatpush1.msra.mxu0 %v493
        %830 = vmatprep.subr.mxu0 0.0
        %831 = vmatpush1.msra.mxu0 %v490
        %832 = vmatprep.subr.mxu0 0.0
        %833 = vmatpush1.msra.mxu0 %v487
        %834 = vmatprep.subr.mxu0 0.0
        %835 = vmatpush1.msra.mxu0 %v484
        %836 = vmatprep.subr.mxu0 0.0
        %837 = vmatpush1.msra.mxu0 %v481
        %838 = vmatprep.subr.mxu0 0.0
        %839 = vmatpush1.msra.mxu0 %v478
        %840 = vmatprep.subr.mxu0 0.0
        %841 = vmatpush2.msra.mxu0 %v571
        %842 = vmatprep.subr.mxu0 0.0
        %843 = vmatpush2.msra.mxu0 %v568
        %844 = vmatprep.subr.mxu0 0.0
        %845 = vmatpush2.msra.mxu0 %v565
        %846 = vmatprep.subr.mxu0 0.0
        %847 = vmatpush2.msra.mxu0 %v562
        %848 = vmatprep.subr.mxu0 0.0
        %849 = vmatpush2.msra.mxu0 %v559
        %850 = vmatprep.subr.mxu0 0.0
        %851 = vmatpush2.msra.mxu0 %v556
        %852 = vmatprep.subr.mxu0 0.0
        %853 = vmatpush2.msra.mxu0 %v553
        %854 = vmatprep.subr.mxu0 0.0
        %855 = vmatpush2.msra.mxu0 %v550
        %856 = vmatprep.subr.mxu0 0.0
        %857 = vmatpush2.msra.mxu0 %v547
        %858 = vmatprep.subr.mxu0 0.0
        %859 = vmatpush2.msra.mxu0 %v544
        %860 = vmatprep.subr.mxu0 0.0
        %861 = vmatpush2.msra.mxu0 %v541
        %862 = vmatprep.subr.mxu0 0.0
        %863 = vmatpush2.msra.mxu0 %v538
        %864 = vmatprep.subr.mxu0 0.0
        %865 = vmatpush2.msra.mxu0 %v535
        %866 = vmatprep.subr.mxu0 0.0
        %867 = vmatpush2.msra.mxu0 %v532
        %868 = vmatprep.subr.mxu0 0.0
        %869 = vmatpush2.msra.mxu0 %v529
        %870 = vmatprep.subr.mxu0 0.0
        %871 = vmatpush2.msra.mxu0 %v526
        %872 = vmatprep.mubr.f32.mxu0 %v379
        %873 = vmatmul.mubr.f32.gmra.mxu0 %v378
        %v874 = vpop.f32.mrf.mxu0
        %v875 = vadd.f32 %v805, %v874
        %v876 = vpop.f32.mrf.mxu0
        %877 = vdwg.mxu0
        %v878 = vld [vmem:[%s5] sm:$0x7]
        %v880 = vlaneseq
        %v881 = vshrl.u32 %v880, 7
        %v882 = vsub.s32 0, %v881
        %v883 = vrot.slane %v878, %v882
        %v884 = vlaneseq
        %v885 = vshrl.u32 %v884, 7
        %v886 = vsub.s32 1, %v885
        %v887 = vrot.slane %v878, %v886
        %v888 = vlaneseq
        %v889 = vshrl.u32 %v888, 7
        %v890 = vsub.s32 2, %v889
        %v891 = vrot.slane %v878, %v890
        %v895 = vadd.f32 %v734, %v883
        %v896 = vadd.f32 %v736, %v887
        %v897 = vadd.f32 %v875, %v891
        %v898 = vmax.f32 %v895, 0.0
        %v899 = vmax.f32 %v896, 0.0
        %v900 = vmax.f32 %v897, 0.0
        %v901 = vld [vmem:[%s6] sm:$0x7]
        %v903 = vlaneseq
        %v904 = vshrl.u32 %v903, 7
        %v905 = vsub.s32 0, %v904
        %v906 = vrot.slane %v901, %v905
        %v907 = vlaneseq
        %v908 = vshrl.u32 %v907, 7
        %v909 = vsub.s32 1, %v908
        %v910 = vrot.slane %v901, %v909
        %v911 = vlaneseq
        %v912 = vshrl.u32 %v911, 7
        %v913 = vsub.s32 2, %v912
        %v914 = vrot.slane %v901, %v913
        %v918 = vmul.f32 %v898, %v906
        %v919 = vmul.f32 %v899, %v910
        %v920 = vmul.f32 %v900, %v914
        %v921 = vadd.f32 %v918, %v919
        %v922 = vadd.f32 %v921, %v920
        %923 = vadd.xlane.f32.xlu0 %v922
        %v924 = vpop.xlane.xlu0 %923
        %v925 = vld [vmem:[#allocation2] sm:$0x1]
        %v927 = vlaneseq
        %v928 = vshrl.u32 %v927, 7
        %v929 = vsub.s32 0, %v928
        %v930 = vrot.slane %v925, %v929
        %v932 = vadd.f32 %v924, %v930
        %vm933 = vcmask 7168
        %934 = vst.msk [vmem:[%s317] sm:$0xff] %vm933, %v932
        %p935 = scmp.lt.s32.totalorder %s22, 1
        %s936 = scalar_select %p935, %s22, 1
        %s937 = smul.addr %s936, 8
        %s938 = scalar_lea.vmem %s8, %s937
        // Predicated region
        $region57: #{tpu_custom_call.1} parent=51 // pred_check
          %p939 = pneg %p213
        $region58: #{tpu_custom_call.1} parent=51 // pred_check_branch
          %941 = sbr.rel (%p939) target = $region60
        $region59: #{tpu_custom_call.1} parent=51 // pred_region
          _
        $region60: #{tpu_custom_call.1} parent=51 // pred_fallthru
          _
      $region52: #{tpu_custom_call.1} parent=5 // pred_fallthru
        _
      %p942 = scmp.le.s32.totalorder 2, %s17
      // Predicated region
      $region61: #{tpu_custom_call.1} parent=5 // pred_check
        %p943 = pneg %p942
      $region62: #{tpu_custom_call.1} parent=5 // pred_check_branch
        %945 = sbr.rel (%p943) target = $region64
      $region63: #{tpu_custom_call.1} parent=5 // pred_region
        %s946 = ssub.s32 %s17, 2
        // Predicated region
        $region65: #{tpu_custom_call.1} parent=63 // pred_check
          %p947 = pneg %p219
        $region66: #{tpu_custom_call.1} parent=63 // pred_check_branch
          %949 = sbr.rel (%p947) target = $region68
        $region67: #{tpu_custom_call.1} parent=63 // pred_region
          %p950 = scmp.lt.s32.totalorder %s23, 1
          %s951 = scalar_select %p950, %s23, 1
          %s952 = smul.addr %s951, 8
          %s953 = scalar_lea.vmem %s8, %s952
        $region68: #{tpu_custom_call.1} parent=63 // pred_fallthru
          _
      $region64: #{tpu_custom_call.1} parent=5 // pred_fallthru
        _
    $region6: #{tpu_custom_call.1} parent=1 // loop_footer
      %s21 = sadd.s32 1, %s17
    $region7: #{tpu_custom_call.1} parent=1 // loop_footer_branch
      %16 = sbr.rel target = $region3
    $region8: #{tpu_custom_call.1} parent=1 // loop_exit
      _
    %954 = vsyncpa [#allocation4], 1
    %s955 = scalar_lea.sflag [#allocation4], 1
    %956 = vsyncpa %s955, 1

</llo_original>
